<compile_context>
chip_gen: v7x
topology: tpu7x:2x2x1
jax: 0.10.0
libtpu: 0.0.40
codegen_flags: <defaults>
</compile_context>

<pallas_src>
import functools

import numpy as np
import jax
import jax.numpy as jnp
from jax import lax
from jax.experimental import pallas as pl
from jax.experimental.pallas import tpu as pltpu

EPS = 1e-5


def _ln(x):
    """LayerNorm without scale/offset, non-fast variance, eps=1e-5 (f32)."""
    m = jnp.mean(x, axis=-1, keepdims=True)
    c = x - m
    v = jnp.mean(c * c, axis=-1, keepdims=True)
    return c * lax.rsqrt(v + EPS)


def _chip_kind():
    try:
        return jax.devices()[0].device_kind.lower()
    except Exception:
        return ""


def _vmem_limit_bytes():
    # v7x: 64 MiB physical -> leave headroom; v5e/v6e: 128 MiB physical.
    if "v7" in _chip_kind():
        return 56 * 1024 * 1024
    return 96 * 1024 * 1024


def _auto_batch_split(batch):
    # Split the batch across the two TensorCores only on v7x.
    if "v7" in _chip_kind() and batch % 2 == 0:
        return 2
    return 1


# ---------------------------------------------------------------------------
# Kernel 1: pair logits projection with fused pair LayerNorm
#   per column-tile j:
#     pln  = LN(pair_flat[j*tile:(j+1)*tile, :]) * scale          (tile, P)
#     out  = proj_all (L*H, P)  contract_P  pln (tile, P)   ->    (L*H, tile)
# ---------------------------------------------------------------------------
def pair_logits_kernel(proj_ref, scale_ref, pc_ref, o_ref):
    pc = pc_ref[...].astype(jnp.float32)                       # (tile, P)
    pln = (_ln(pc) * scale_ref[...]).astype(jnp.bfloat16)      # (tile, P)
    o_ref[...] = lax.dot_general(
        proj_ref[...], pln,
        dimension_numbers=(((1,), (1,)), ((), ())),            # contract on P
        preferred_element_type=jnp.float32,
    ).astype(o_ref.dtype)


def _pick_col_tile(nn):
    for t in (8192, 4096, 2048, 1024, 512, 256, 128):
        if nn % t == 0:
            return t
    return nn


def compute_pair_logits(pair_cond, pair_ln_scale, pair_proj, *, num_head):
    N = pair_cond.shape[0]
    NS, P, Q = pair_proj.shape                 # Q = super_block_size * num_head
    SBS = Q // num_head
    L = NS * SBS
    NN = N * N
    NSQ = NS * Q                               # = L * num_head (fills the MXU M dim)

    pair_flat = pair_cond.reshape(NN, P).astype(jnp.float32)
    proj_all = jnp.transpose(pair_proj, (0, 2, 1)).reshape(NSQ, P).astype(jnp.bfloat16)
    scale = pair_ln_scale.reshape(1, P).astype(jnp.float32)

    tile = _pick_col_tile(NN)
    out = pl.pallas_call(
        pair_logits_kernel,
        out_shape=jax.ShapeDtypeStruct((NSQ, NN), jnp.bfloat16),
        grid_spec=pltpu.PrefetchScalarGridSpec(
            num_scalar_prefetch=0,
            grid=(NN // tile,),
            in_specs=[
                pl.BlockSpec((NSQ, P), lambda j: (0, 0)),
                pl.BlockSpec((1, P), lambda j: (0, 0)),
                pl.BlockSpec((tile, P), lambda j: (j, 0)),
            ],
            out_specs=pl.BlockSpec((NSQ, tile), lambda j: (0, j)),
        ),
        compiler_params=pltpu.CompilerParams(
            dimension_semantics=("parallel",),
            vmem_limit_bytes=_vmem_limit_bytes()),
    )(proj_all, scale, pair_flat)

    # (L*H, N*N) -> (L, H, N, N): pure reshape, no transpose.
    return out.reshape(L, num_head, N, N)


# ---------------------------------------------------------------------------
# Kernel 2: the full transformer block stack, grid = (batch_split, num_blocks)
# ---------------------------------------------------------------------------
def transformer_stack_kernel(
    act_ref, mb_ref, sc_ref, scln_ref, plog_ref,
    a_scln_ref, a_cond_w_ref, a_scale_b_ref,
    qkvg_w_ref, q_b_ref, out_w_ref,
    azi_w_ref, azi_b_ref,
    f_scln_ref, f_cond_w_ref, f_scale_b_ref,
    ffw1_w_ref, ffw2_w_ref,
    o_ref,
    wa_ref,
    *, batch, num_head, key_dim_per_head, value_dim_per_head, has_pair):
    B = batch
    H = num_head
    Dk = key_dim_per_head
    Dv = value_dim_per_head
    bf16 = jnp.bfloat16
    f32 = jnp.float32
    l = pl.program_id(1)

    # Output ref doubles as the running-activation accumulator (its block index
    # is constant across l, so it stays VMEM resident; HBM writeback happens
    # once per batch slice).
    @pl.when(l == 0)
    def _init():
        o_ref[...] = act_ref[...]

    x3 = o_ref[...]                        # (B, N, C) f32 running activation
    _, N, C = x3.shape
    HDk, HDv = H * Dk, H * Dv
    sc_raw = sc_ref[...]                   # (N, S)
    sc_ln = scln_ref[...]                  # (N, S) = LN(single_cond), precomputed
    mask_bias = mb_ref[...]                # (B, 1, N) f32 = 1e9 * (mask - 1)

    # ---- per-block conditioning (batch invariant: computed once per block) ----
    sc_a = (sc_ln * a_scln_ref[0]).astype(bf16)
    cond_a = jnp.dot(sc_a, a_cond_w_ref[0], preferred_element_type=f32)   # (N, 2C)
    scale_a = jax.nn.sigmoid(cond_a[:, :C] + a_scale_b_ref[0])            # (N, C)
    bias_a = cond_a[:, C:]

    sc_f = (sc_ln * f_scln_ref[0]).astype(bf16)
    cond_f = jnp.dot(sc_f, f_cond_w_ref[0], preferred_element_type=f32)
    scale_f = jax.nn.sigmoid(cond_f[:, :C] + f_scale_b_ref[0])
    bias_f = cond_f[:, C:]

    azi = jax.nn.sigmoid(
        jnp.dot(sc_raw.astype(bf16), azi_w_ref[0], preferred_element_type=f32)
        + azi_b_ref[0])                                                   # (N, 2C)
    azc_a = azi[:, :C]
    azc_f = azi[:, C:]

    # ---------------- self attention ----------------
    ln_x = _ln(x3)
    x_ada = scale_a[None] * ln_x + bias_a[None]                           # (B, N, C)
    x_ada2d = x_ada.reshape(B * N, C).astype(bf16)

    # Fused q|k|v|gate projection (q weights/bias pre-scaled by 1/sqrt(Dk)).
    qkvg = jnp.dot(x_ada2d, qkvg_w_ref[0], preferred_element_type=f32)    # (BN, 2HDk+2HDv)
    q = qkvg[:, :HDk] + q_b_ref[0]
    k = qkvg[:, HDk:2 * HDk]
    v = qkvg[:, 2 * HDk:2 * HDk + HDv]
    gate = jax.nn.sigmoid(qkvg[:, 2 * HDk + HDv:])

    # Keep pair logits in bf16 (no up-front f32 copy); the add below upcasts.
    plog = plog_ref[0] if has_pair else None                              # (H, N, N) bf16

    for b in range(B):                      # static, small batch loop
        qb = q[b * N:(b + 1) * N].reshape(N, H, Dk)
        kb = k[b * N:(b + 1) * N].reshape(N, H, Dk)
        vb = v[b * N:(b + 1) * N].reshape(N, H, Dv)
        qh = pltpu.einshape('nhd->hnd', qb)                               # (H, N, Dk)
        kh = pltpu.einshape('nhd->hnd', kb)
        vh = pltpu.einshape('nhd->hnd', vb)
        logits = jnp.einsum('hqd,hkd->hqk', qh.astype(bf16), kh.astype(bf16),
                            preferred_element_type=f32)                   # (H, N, N)
        logits = logits + mask_bias[b]                                    # (1, N)
        if has_pair:
            logits = logits + plog                                        # bf16 -> f32 add
        m = jnp.max(logits, axis=-1, keepdims=True)
        e = jnp.exp(logits - m)
        probs = e * pl.reciprocal(jnp.sum(e, axis=-1, keepdims=True), approx=True)
        wab = jnp.einsum('hqk,hkd->hqd', probs.astype(bf16), vh.astype(bf16),
                         preferred_element_type=f32)                      # (H, N, Dv)
        wab = pltpu.einshape('hnd->nhd', wab).reshape(N, HDv)
        # Write per-batch result into VMEM scratch (no axis-0 concat relayout).
        wa_ref[b * N:(b + 1) * N, :] = wab * gate[b * N:(b + 1) * N, :]

    attn = jnp.dot(wa_ref[...].astype(bf16), out_w_ref[0], preferred_element_type=f32)
    x3 = x3 + azc_a[None] * attn.reshape(B, N, C)

    # ---------------- transition block (SwiGLU) ----------------
    ln_x2 = _ln(x3)
    x_ada2 = scale_f[None] * ln_x2 + bias_f[None]
    hdn = jnp.dot(x_ada2.reshape(B * N, C).astype(bf16), ffw1_w_ref[0],
                  preferred_element_type=f32)                             # (BN, 2FC)
    FC = ffw2_w_ref.shape[1]
    c = jax.nn.silu(hdn[:, :FC]) * hdn[:, FC:]
    ffw = jnp.dot(c.astype(bf16), ffw2_w_ref[0], preferred_element_type=f32)
    x3 = x3 + azc_f[None] * ffw.reshape(B, N, C)

    o_ref[...] = x3


def transformer_forward(params, act, mask, single_cond, pair_cond, *,
                        num_head, super_block_size, batch_split=None):
    f32, bf16 = jnp.float32, jnp.bfloat16
    B, N, C = act.shape
    L = params['q_w'].shape[0]
    S = single_cond.shape[-1]
    H = num_head
    HDk = params['q_w'].shape[2]
    HDv = params['v_w'].shape[2]
    Dk = HDk // H
    Dv = HDv // H
    FC = params['ffw2_w'].shape[1]

    CS = batch_split if batch_split is not None else _auto_batch_split(B)
    if B % CS != 0:
        CS = 1
    Bc = B // CS

    has_pair = pair_cond is not None
    if has_pair:
        plog = compute_pair_logits(pair_cond, params['pair_ln_scale'],
                                   params['pair_proj'], num_head=H)       # (L,H,N,N) bf16
    else:
        # Tiny constant-index dummy (never read): no (H,N,N) zero buffers in VMEM.
        plog = jnp.zeros((1, 1, 8, 128), bf16)

    # Host-side weight fusion + bf16 casts (in real use: pre-fused once).
    qscale = Dk ** -0.5
    qkvg_w = jnp.concatenate(
        [params['q_w'] * qscale, params['k_w'], params['v_w'], params['gate_w']],
        axis=-1).astype(bf16)                                             # (L, C, 2HDk+2HDv)
    q_b = (params['q_b'] * qscale).astype(f32)
    attn_cond_w = jnp.concatenate(
        [params['attn_scale_w'], params['attn_bias_w']], axis=-1).astype(bf16)
    ffw_cond_w = jnp.concatenate(
        [params['ffw_scale_w'], params['ffw_bias_w']], axis=-1).astype(bf16)
    azi_w = jnp.concatenate([params['azi_w'], params['ffw_azi_w']], axis=-1).astype(bf16)
    azi_b = jnp.concatenate([params['azi_b'], params['ffw_azi_b']], axis=-1).astype(f32)
    out_w = params['out_w'].astype(bf16)
    ffw1_w = params['ffw1_w'].astype(bf16)
    ffw2_w = params['ffw2_w'].astype(bf16)

    act = act.astype(f32)
    sc_raw = single_cond.astype(f32)
    sc_ln = _ln(sc_raw)                                                    # (N, S)
    mask_bias = (1e9 * (mask.astype(f32) - 1.0)).reshape(B, 1, N)          # (B, 1, N)

    lam3 = lambda c, l: (l, 0, 0)
    bsplit3 = lambda c, l: (c, 0, 0)
    c2 = lambda c, l: (0, 0)
    if has_pair:
        plog_spec = pl.BlockSpec((1, H, N, N), lambda c, l: (l, 0, 0, 0))
    else:
        plog_spec = pl.BlockSpec((1, 1, 8, 128), lambda c, l: (0, 0, 0, 0))

    QKVG = 2 * HDk + 2 * HDv
    in_specs = [
        pl.BlockSpec((Bc, N, C), bsplit3),        # act (read once per batch slice)
        pl.BlockSpec((Bc, 1, N), bsplit3),        # mask bias
        pl.BlockSpec((N, S), c2),                 # single cond (raw)
        pl.BlockSpec((N, S), c2),                 # LN(single cond)
        plog_spec,                                # pair logits (per block / dummy)
        pl.BlockSpec((1, 1, S), lam3),            # attn single-cond LN scale
        pl.BlockSpec((1, S, 2 * C), lam3),        # attn cond [scale|bias] W
        pl.BlockSpec((1, 1, C), lam3),            # attn cond scale b
        pl.BlockSpec((1, C, QKVG), lam3),         # fused q|k|v|gate W
        pl.BlockSpec((1, 1, HDk), lam3),          # q bias (pre-scaled)
        pl.BlockSpec((1, HDv, C), lam3),          # attention output W
        pl.BlockSpec((1, S, 2 * C), lam3),        # fused [attn|ffw] adaptive-zero W
        pl.BlockSpec((1, 1, 2 * C), lam3),        # fused adaptive-zero b
        pl.BlockSpec((1, 1, S), lam3),            # ffw single-cond LN scale
        pl.BlockSpec((1, S, 2 * C), lam3),        # ffw cond [scale|bias] W
        pl.BlockSpec((1, 1, C), lam3),            # ffw cond scale b
        pl.BlockSpec((1, C, 2 * FC), lam3),       # ffw transition1 W
        pl.BlockSpec((1, FC, C), lam3),           # ffw transition2 W
    ]
    args = (act, mask_bias, sc_raw, sc_ln, plog,
            params['attn_scln_scale'], attn_cond_w, params['attn_scale_b'],
            qkvg_w, q_b, out_w, azi_w, azi_b,
            params['ffw_scln_scale'], ffw_cond_w, params['ffw_scale_b'],
            ffw1_w, ffw2_w)

    kernel = functools.partial(
        transformer_stack_kernel, batch=Bc, num_head=H,
        key_dim_per_head=Dk, value_dim_per_head=Dv, has_pair=has_pair)

    return pl.pallas_call(
        kernel,
        out_shape=jax.ShapeDtypeStruct((B, N, C), f32),
        grid_spec=pltpu.PrefetchScalarGridSpec(
            num_scalar_prefetch=0,
            grid=(CS, L),                              # (batch split, block axis)
            in_specs=in_specs,
            out_specs=pl.BlockSpec((Bc, N, C), bsplit3),  # resident accumulator
            scratch_shapes=[pltpu.VMEM((Bc * N, HDv), f32)],
        ),
        compiler_params=pltpu.CompilerParams(
            dimension_semantics=("parallel", "arbitrary"),
            vmem_limit_bytes=_vmem_limit_bytes()),
    )(*args)


# ---------------------------------------------------------------------------
# Deterministic parameter init (shapes follow the PyTorch module __init__)
# ---------------------------------------------------------------------------
def init_params(key, *, num_blocks, super_block_size, num_head, act_channels,
                pair_channels, single_channels, num_intermediate_factor):
    C, S, P, H = act_channels, single_channels, pair_channels, num_head
    Dk = C // H
    Dv = C // H
    F = num_intermediate_factor
    L = num_blocks
    NS = num_blocks // super_block_size
    keys = iter(jax.random.split(key, 64))

    def nrm(shape, scale=0.1):
        return scale * jax.random.normal(next(keys), shape, jnp.float32)

    p = {}
    p['pair_ln_scale'] = 1.0 + nrm((1, P))
    p['pair_proj'] = nrm((NS, P, super_block_size * H), 0.2)
    # --- self-attention (per block, stacked on leading axis L) ---
    p['attn_scln_scale'] = 1.0 + nrm((L, 1, S))
    p['attn_scale_w'] = nrm((L, S, C)); p['attn_scale_b'] = nrm((L, 1, C))
    p['attn_bias_w'] = nrm((L, S, C))
    p['q_w'] = nrm((L, C, H * Dk)); p['q_b'] = nrm((L, 1, H * Dk))
    p['k_w'] = nrm((L, C, H * Dk))
    p['v_w'] = nrm((L, C, H * Dv))
    p['gate_w'] = nrm((L, C, H * Dv))
    p['out_w'] = nrm((L, H * Dv, C))
    p['azi_w'] = nrm((L, S, C)); p['azi_b'] = nrm((L, 1, C))
    # --- transition block (per block) ---
    p['ffw_scln_scale'] = 1.0 + nrm((L, 1, S))
    p['ffw_scale_w'] = nrm((L, S, C)); p['ffw_scale_b'] = nrm((L, 1, C))
    p['ffw_bias_w'] = nrm((L, S, C))
    p['ffw1_w'] = nrm((L, C, 2 * F * C))
    p['ffw2_w'] = nrm((L, F * C, C))
    p['ffw_azi_w'] = nrm((L, S, C)); p['ffw_azi_b'] = nrm((L, 1, C))
    return p


# ---------------------------------------------------------------------------
# Pure-JAX f32 reference (mirrors the PyTorch forward exactly)
# ---------------------------------------------------------------------------
def reference_forward(params, act, mask, single_cond, pair_cond, *,
                      num_head, super_block_size):
    H = num_head
    L = params['q_w'].shape[0]
    B, N, C = act.shape
    Dk = params['q_w'].shape[2] // H
    Dv = params['v_w'].shape[2] // H
    FC = params['ffw2_w'].shape[1]
    x = act.astype(jnp.float32)
    sc = single_cond.astype(jnp.float32)
    mask_bias = 1e9 * (mask.astype(jnp.float32) - 1.0)          # (B, N)

    if pair_cond is None:
        plog_all = jnp.zeros((L, H, N, N), jnp.float32)
    else:
        pa = _ln(pair_cond.astype(jnp.float32)) * params['pair_ln_scale'][0]
        proj = jnp.einsum('abp,spq->sabq', pa, params['pair_proj'])
        NS = params['pair_proj'].shape[0]
        plog_all = proj.reshape(NS, N, N, super_block_size, H)
        plog_all = plog_all.transpose(0, 3, 4, 1, 2).reshape(L, H, N, N)

    for l in range(L):
        # self attention
        ln_x = _ln(x)
        sc_ln = _ln(sc) * params['attn_scln_scale'][l]
        ada_scale = sc_ln @ params['attn_scale_w'][l] + params['attn_scale_b'][l]
        ada_bias = sc_ln @ params['attn_bias_w'][l]
        x_ada = jax.nn.sigmoid(ada_scale)[None] * ln_x + ada_bias[None]
        q = (x_ada @ params['q_w'][l] + params['q_b'][l]).reshape(B, N, H, Dk)
        k = (x_ada @ params['k_w'][l]).reshape(B, N, H, Dk)
        v = (x_ada @ params['v_w'][l]).reshape(B, N, H, Dv)
        logits = jnp.einsum('bqhd,bkhd->bhqk', q * (Dk ** -0.5), k)
        logits = logits + plog_all[l][None] + mask_bias[:, None, None, :]
        w = jax.nn.softmax(logits, axis=-1)
        wa = jnp.einsum('bhqk,bkhd->bqhd', w, v).reshape(B, N, H * Dv)
        wa = wa * jax.nn.sigmoid(x_ada @ params['gate_w'][l])
        attn = wa @ params['out_w'][l]
        azc = jax.nn.sigmoid(sc @ params['azi_w'][l] + params['azi_b'][l])[None]
        x = x + azc * attn
        # transition
        ln_x2 = _ln(x)
        sc_ln2 = _ln(sc) * params['ffw_scln_scale'][l]
        ada_scale2 = sc_ln2 @ params['ffw_scale_w'][l] + params['ffw_scale_b'][l]
        ada_bias2 = sc_ln2 @ params['ffw_bias_w'][l]
        x_ada2 = jax.nn.sigmoid(ada_scale2)[None] * ln_x2 + ada_bias2[None]
        hdn = x_ada2 @ params['ffw1_w'][l]
        a, b = hdn[..., :FC], hdn[..., FC:]
        c = jax.nn.silu(a) * b
        ffw = c @ params['ffw2_w'][l]
        azc2 = jax.nn.sigmoid(sc @ params['ffw_azi_w'][l] + params['ffw_azi_b'][l])[None]
        x = x + azc2 * ffw
    return x


if __name__ == "__main__":
    # Small shapes consistent with the module's forward.
    B, N = 2, 16
    C, S, P = 64, 32, 16
    H = 4
    num_blocks, super_block_size = 4, 2
    F = 2

    key = jax.random.PRNGKey(0)
    kp, ka, km, ks, kc = jax.random.split(key, 5)
    params = init_params(kp, num_blocks=num_blocks, super_block_size=super_block_size,
                         num_head=H, act_channels=C, pair_channels=P,
                         single_channels=S, num_intermediate_factor=F)
    act = jax.random.normal(ka, (B, N, C), jnp.float32)
    mask = (jax.random.uniform(km, (B, N)) > 0.15).astype(jnp.float32)
    single_cond = jax.random.normal(ks, (N, S), jnp.float32)
    pair_cond = jax.random.normal(kc, (N, N, P), jnp.float32)

    out = transformer_forward(params, act, mask, single_cond, pair_cond,
                              num_head=H, super_block_size=super_block_size)
    out = jax.block_until_ready(out)

    ref = reference_forward(params, act, mask, single_cond, pair_cond,
                            num_head=H, super_block_size=super_block_size)
    ref = jax.block_until_ready(ref)

    # bf16 MXU path vs pure-f32 reference: loosened tolerance.
    if not np.allclose(np.asarray(out), np.asarray(ref), atol=5e-2, rtol=5e-2):
        raise AssertionError("Pallas kernel output mismatch vs JAX reference")
    print("KERNEL_OK")
</pallas_src>

<mosaic_0001>
module attributes {stable_mosaic.version = 11 : i64} {
  func.func @pair_logits_kernel(%arg0: i32, %arg1: memref<16x16xbf16, #tpu.memory_space<vmem>>, %arg2: memref<1x16xf32, #tpu.memory_space<vmem>>, %arg3: memref<256x16xf32, #tpu.memory_space<vmem>>, %arg4: memref<16x256xbf16, #tpu.memory_space<vmem>>) attributes {dimension_semantics = [#tpu.dimension_semantics<parallel>], iteration_bounds = array<i64: 1>, scalar_prefetch = 0 : i64, scratch_operands = 0 : i64, tpu.core_type = #tpu.core_type<tc>, window_params = [{pipeline_mode = #tpu.pipeline_mode<synchronous>, transform_indices = @transform_0, window_bounds = array<i64: 16, 16>}, {pipeline_mode = #tpu.pipeline_mode<synchronous>, transform_indices = @transform_1, window_bounds = array<i64: 1, 16>}, {transform_indices = @transform_2, window_bounds = array<i64: 256, 16>}, {transform_indices = @transform_3, window_bounds = array<i64: 16, 256>}]} {
    %c0 = arith.constant 0 : index
    %c0_0 = arith.constant 0 : index
    %0 = vector.load %arg3[%c0, %c0_0] : memref<256x16xf32, #tpu.memory_space<vmem>>, vector<256x16xf32>
    %cst = arith.constant dense<0.000000e+00> : vector<256xf32>
    %1 = vector.multi_reduction <add>, %0, %cst [1] : vector<256x16xf32> to vector<256xf32>
    %2 = vector.shape_cast %1 : vector<256xf32> to vector<256x1xf32>
    %cst_1 = arith.constant 1.600000e+01 : f32
    %3 = vector.broadcast %cst_1 : f32 to vector<256x1xf32>
    %4 = arith.divf %2, %3 : vector<256x1xf32>
    %5 = vector.broadcast %4 : vector<256x1xf32> to vector<256x16xf32>
    %6 = arith.subf %0, %5 : vector<256x16xf32>
    %7 = arith.mulf %6, %6 : vector<256x16xf32>
    %cst_2 = arith.constant dense<0.000000e+00> : vector<256xf32>
    %8 = vector.multi_reduction <add>, %7, %cst_2 [1] : vector<256x16xf32> to vector<256xf32>
    %9 = vector.shape_cast %8 : vector<256xf32> to vector<256x1xf32>
    %cst_3 = arith.constant 1.600000e+01 : f32
    %10 = vector.broadcast %cst_3 : f32 to vector<256x1xf32>
    %11 = arith.divf %9, %10 : vector<256x1xf32>
    %cst_4 = arith.constant 9.99999974E-6 : f32
    %12 = vector.broadcast %cst_4 : f32 to vector<256x1xf32>
    %13 = arith.addf %11, %12 : vector<256x1xf32>
    %14 = math.rsqrt %13 : vector<256x1xf32>
    %15 = vector.broadcast %14 : vector<256x1xf32> to vector<256x16xf32>
    %16 = arith.mulf %6, %15 : vector<256x16xf32>
    %c0_5 = arith.constant 0 : index
    %c0_6 = arith.constant 0 : index
    %17 = vector.load %arg2[%c0_5, %c0_6] : memref<1x16xf32, #tpu.memory_space<vmem>>, vector<1x16xf32>
    %18 = vector.broadcast %17 : vector<1x16xf32> to vector<256x16xf32>
    %19 = arith.mulf %16, %18 : vector<256x16xf32>
    %20 = arith.truncf %19 : vector<256x16xf32> to vector<256x16xbf16>
    %c0_7 = arith.constant 0 : index
    %c0_8 = arith.constant 0 : index
    %21 = vector.load %arg1[%c0_7, %c0_8] : memref<16x16xbf16, #tpu.memory_space<vmem>>, vector<16x16xbf16>
    %cst_9 = arith.constant dense<0.000000e+00> : vector<16x256xf32>
    %22 = tpu.matmul %21, %20, %cst_9 {dimension_numbers = #tpu.dot_dimension_numbers<[1], [1], [0], [0], [0, 0, 1, 0], [], []>} : vector<16x16xbf16>, vector<256x16xbf16>, vector<16x256xf32> -> vector<16x256xf32>
    %23 = arith.truncf %22 : vector<16x256xf32> to vector<16x256xbf16>
    %c0_10 = arith.constant 0 : index
    %c0_11 = arith.constant 0 : index
    %24 = vector.load %arg4[%c0_10, %c0_11] : memref<16x256xbf16, #tpu.memory_space<vmem>>, vector<16x256xbf16>
    tpu.vector_store %arg4[%c0_10, %c0_11], %23 {strides = array<i32>} : memref<16x256xbf16, #tpu.memory_space<vmem>>, vector<16x256xbf16>,
    return
  }
  func.func @transform_0(%arg0: i32) -> (i32, i32) {
    %c0_i32 = arith.constant 0 : i32
    %c0_i32_0 = arith.constant 0 : i32
    %c0_i32_1 = arith.constant 0 : i32
    return %c0_i32, %c0_i32_0 : i32, i32
  }
  func.func @transform_1(%arg0: i32) -> (i32, i32) {
    %c0_i32 = arith.constant 0 : i32
    %c0_i32_0 = arith.constant 0 : i32
    %c0_i32_1 = arith.constant 0 : i32
    return %c0_i32, %c0_i32_0 : i32, i32
  }
  func.func @transform_2(%arg0: i32) -> (i32, i32) {
    %c0_i32 = arith.constant 0 : i32
    %c0_i32_0 = arith.constant 0 : i32
    return %arg0, %c0_i32 : i32, i32
  }
  func.func @transform_3(%arg0: i32) -> (i32, i32) {
    %c0_i32 = arith.constant 0 : i32
    %c0_i32_0 = arith.constant 0 : i32
    return %c0_i32, %arg0 : i32, i32
  }
}

</mosaic_0001>

<llo_original>
// kernel: tpu_custom_call.1
$region0: #{tpu_custom_call.1}
  #allocation0 [shape = 'u32[]', space=smem, size = 0x4, offset = 0x4, fixed_abs, tag = 'smem constant byte address 0x4 - core index']
  #allocation1 [shape = 'u32[144,128]{1,0:T(1,128)}', space=vmem, size = 0x12000, scoped, tag = 'internal scratch']
  %s0 = inlined_call_operand.hbm [shape: bf16[16,16], index: 0, kind: input, shape index: {}]
  %s1 = inlined_call_operand.hbm [shape: f32[1,16], index: 1, kind: input, shape index: {}]
  %s2 = inlined_call_operand.hbm [shape: f32[256,16], index: 2, kind: input, shape index: {}]
  %s3 = inlined_call_operand.hbm [shape: bf16[16,256], index: 3, kind: output, shape index: {}]
  %s4 = sld [smem:[#allocation0]]
  $region34: #{tpu_custom_call.1} parent=0
    _
  %s6 = ssub.s32 1, %s4
  %s7 = scalar_select 0, %s6, %s4
  $region1: #{tpu_custom_call.1} parent=0
    #allocation2 [shape = 'u8[4096]{0}', space=vmem, size = 0x1000, scoped, tag = 'input window, operand 0, single buffered']
    #allocation3 [shape = 's32[1]{0}', space=sflag, size = 0x4, scoped, tag = 'scoped memory for tpu_custom_call.1']
    #allocation4 [shape = 's32[1]{0}', space=sflag, size = 0x4, scoped, tag = 'scoped memory for tpu_custom_call.1']
    #allocation5 [shape = 'u8[512]{0}', space=vmem, size = 0x400, scoped, tag = 'input window, operand 1, single buffered']
    #allocation6 [shape = 's32[1]{0}', space=sflag, size = 0x4, scoped, tag = 'scoped memory for tpu_custom_call.1']
    #allocation7 [shape = 'u8[131072]{0}', space=vmem, size = 0x20000, scoped, tag = 'input window, operand 2, single buffered']
    #allocation8 [shape = 'u8[8192]{0}', space=vmem, size = 0x2000, scoped, tag = 'output window, operand 0, single buffered']
    %8 = vsyncpa [#allocation3], 0
    %9 = vsyncpa [#allocation6], 0
    %10 = vsyncpa [#allocation4], 0
    // Predicated region
    $region2: #{tpu_custom_call.1} parent=1 // pred_check
      _
    $region3: #{tpu_custom_call.1} parent=1 // pred_check_branch
      %12 = sbr.rel (0) target = $region5
    $region4: #{tpu_custom_call.1} parent=1 // pred_region
      %s14 = ssub.s32 128, 128
      %15 = vsyncadd [#allocation3], %s14
      %s16 = sshll.u32 [#allocation2], 4
      %s17 = int_to_ptr.vmem [resolvable:$true] %s16
      %22 = dma.hbm_to_vmem [thread:$0]  %s0, 128, %s17, [#allocation3], 64, 64, 4
    $region5: #{tpu_custom_call.1} parent=1 // pred_fallthru
      _
    // Predicated region
    $region6: #{tpu_custom_call.1} parent=1 // pred_check
      _
    $region7: #{tpu_custom_call.1} parent=1 // pred_check_branch
      %24 = sbr.rel (0) target = $region9
    $region8: #{tpu_custom_call.1} parent=1 // pred_region
      %s26 = ssub.s32 16, 16
      %27 = vsyncadd [#allocation6], %s26
      %s29 = sshll.u32 [#allocation5], 4
      %s30 = int_to_ptr.vmem [resolvable:$true] %s29
      %32 = dma.hbm_to_vmem [thread:$0]  %s1, 16, %s30, [#allocation6]
    $region9: #{tpu_custom_call.1} parent=1 // pred_fallthru
      _
    // Predicated region
    $region10: #{tpu_custom_call.1} parent=1 // pred_check
      _
    $region11: #{tpu_custom_call.1} parent=1 // pred_check_branch
      %34 = sbr.rel (0) target = $region13
    $region12: #{tpu_custom_call.1} parent=1 // pred_region
      %s36 = ssub.s32 4096, 4096
      %37 = vsyncadd [#allocation6], %s36
      %s38 = sshll.u32 [#allocation7], 4
      %s39 = int_to_ptr.vmem [resolvable:$true] %s38
      %44 = dma.hbm_to_vmem [thread:$0]  %s2, 4096, %s39, [#allocation6], 128, 128, 8
    $region13: #{tpu_custom_call.1} parent=1 // pred_fallthru
      _
    // Predicated region
    $region14: #{tpu_custom_call.1} parent=1 // pred_check
      _
    $region15: #{tpu_custom_call.1} parent=1 // pred_check_branch
      %46 = sbr.rel (0) target = $region17
    $region16: #{tpu_custom_call.1} parent=1 // pred_region
      %47 = dma.done [#allocation3], 128
    $region17: #{tpu_custom_call.1} parent=1 // pred_fallthru
      _
    // Predicated region
    $region18: #{tpu_custom_call.1} parent=1 // pred_check
      _
    $region19: #{tpu_custom_call.1} parent=1 // pred_check_branch
      %49 = sbr.rel (0) target = $region21
    $region20: #{tpu_custom_call.1} parent=1 // pred_region
      %50 = dma.done [#allocation6], 16
    $region21: #{tpu_custom_call.1} parent=1 // pred_fallthru
      _
    // Predicated region
    $region22: #{tpu_custom_call.1} parent=1 // pred_check
      _
    $region23: #{tpu_custom_call.1} parent=1 // pred_check_branch
      %52 = sbr.rel (0) target = $region25
    $region24: #{tpu_custom_call.1} parent=1 // pred_region
      %53 = dma.done [#allocation6], 4096
    $region25: #{tpu_custom_call.1} parent=1 // pred_fallthru
      _
    %v55 = vld [vmem:[#allocation7] sm:$0xff]
    %v56 = vld [vmem:[#allocation7 + $0x8] sm:$0xff]
    %v57 = vld [vmem:[#allocation7 + $0x10] sm:$0xff]
    %v58 = vld [vmem:[#allocation7 + $0x18] sm:$0xff]
    %v59 = vld [vmem:[#allocation7 + $0x20] sm:$0xff]
    %v60 = vld [vmem:[#allocation7 + $0x28] sm:$0xff]
    %v61 = vld [vmem:[#allocation7 + $0x30] sm:$0xff]
    %v62 = vld [vmem:[#allocation7 + $0x38] sm:$0xff]
    %v63 = vld [vmem:[#allocation7 + $0x40] sm:$0xff]
    %v64 = vld [vmem:[#allocation7 + $0x48] sm:$0xff]
    %v65 = vld [vmem:[#allocation7 + $0x50] sm:$0xff]
    %v66 = vld [vmem:[#allocation7 + $0x58] sm:$0xff]
    %v67 = vld [vmem:[#allocation7 + $0x60] sm:$0xff]
    %v68 = vld [vmem:[#allocation7 + $0x68] sm:$0xff]
    %v69 = vld [vmem:[#allocation7 + $0x70] sm:$0xff]
    %v70 = vld [vmem:[#allocation7 + $0x78] sm:$0xff]
    %v71 = vld [vmem:[#allocation7 + $0x80] sm:$0xff]
    %v72 = vld [vmem:[#allocation7 + $0x88] sm:$0xff]
    %v73 = vld [vmem:[#allocation7 + $0x90] sm:$0xff]
    %v74 = vld [vmem:[#allocation7 + $0x98] sm:$0xff]
    %v75 = vld [vmem:[#allocation7 + $0xa0] sm:$0xff]
    %v76 = vld [vmem:[#allocation7 + $0xa8] sm:$0xff]
    %v77 = vld [vmem:[#allocation7 + $0xb0] sm:$0xff]
    %v78 = vld [vmem:[#allocation7 + $0xb8] sm:$0xff]
    %v79 = vld [vmem:[#allocation7 + $0xc0] sm:$0xff]
    %v80 = vld [vmem:[#allocation7 + $0xc8] sm:$0xff]
    %v81 = vld [vmem:[#allocation7 + $0xd0] sm:$0xff]
    %v82 = vld [vmem:[#allocation7 + $0xd8] sm:$0xff]
    %v83 = vld [vmem:[#allocation7 + $0xe0] sm:$0xff]
    %v84 = vld [vmem:[#allocation7 + $0xe8] sm:$0xff]
    %v85 = vld [vmem:[#allocation7 + $0xf0] sm:$0xff]
    %v86 = vld [vmem:[#allocation7 + $0xf8] sm:$0xff]
    %vm87 = vcmask 130048
    %v88 = vsel %vm87, %v55, 0.0
    %89 = vadd.xlane.f32.xlu0 %v88
    %v90 = vpop.xlane.xlu0 %89
    %v91 = vsel %vm87, %v56, 0.0
    %92 = vadd.xlane.f32.xlu0 %v91
    %v93 = vpop.xlane.xlu0 %92
    %v94 = vsel %vm87, %v57, 0.0
    %95 = vadd.xlane.f32.xlu0 %v94
    %v96 = vpop.xlane.xlu0 %95
    %v97 = vsel %vm87, %v58, 0.0
    %98 = vadd.xlane.f32.xlu0 %v97
    %v99 = vpop.xlane.xlu0 %98
    %v100 = vsel %vm87, %v59, 0.0
    %101 = vadd.xlane.f32.xlu0 %v100
    %v102 = vpop.xlane.xlu0 %101
    %v103 = vsel %vm87, %v60, 0.0
    %104 = vadd.xlane.f32.xlu0 %v103
    %v105 = vpop.xlane.xlu0 %104
    %v106 = vsel %vm87, %v61, 0.0
    %107 = vadd.xlane.f32.xlu0 %v106
    %v108 = vpop.xlane.xlu0 %107
    %v109 = vsel %vm87, %v62, 0.0
    %110 = vadd.xlane.f32.xlu0 %v109
    %v111 = vpop.xlane.xlu0 %110
    %v112 = vsel %vm87, %v63, 0.0
    %113 = vadd.xlane.f32.xlu0 %v112
    %v114 = vpop.xlane.xlu0 %113
    %v115 = vsel %vm87, %v64, 0.0
    %116 = vadd.xlane.f32.xlu0 %v115
    %v117 = vpop.xlane.xlu0 %116
    %v118 = vsel %vm87, %v65, 0.0
    %119 = vadd.xlane.f32.xlu0 %v118
    %v120 = vpop.xlane.xlu0 %119
    %v121 = vsel %vm87, %v66, 0.0
    %122 = vadd.xlane.f32.xlu0 %v121
    %v123 = vpop.xlane.xlu0 %122
    %v124 = vsel %vm87, %v67, 0.0
    %125 = vadd.xlane.f32.xlu0 %v124
    %v126 = vpop.xlane.xlu0 %125
    %v127 = vsel %vm87, %v68, 0.0
    %128 = vadd.xlane.f32.xlu0 %v127
    %v129 = vpop.xlane.xlu0 %128
    %v130 = vsel %vm87, %v69, 0.0
    %131 = vadd.xlane.f32.xlu0 %v130
    %v132 = vpop.xlane.xlu0 %131
    %v133 = vsel %vm87, %v70, 0.0
    %134 = vadd.xlane.f32.xlu0 %v133
    %v135 = vpop.xlane.xlu0 %134
    %v136 = vsel %vm87, %v71, 0.0
    %137 = vadd.xlane.f32.xlu0 %v136
    %v138 = vpop.xlane.xlu0 %137
    %v139 = vsel %vm87, %v72, 0.0
    %140 = vadd.xlane.f32.xlu0 %v139
    %v141 = vpop.xlane.xlu0 %140
    %v142 = vsel %vm87, %v73, 0.0
    %143 = vadd.xlane.f32.xlu0 %v142
    %v144 = vpop.xlane.xlu0 %143
    %v145 = vsel %vm87, %v74, 0.0
    %146 = vadd.xlane.f32.xlu0 %v145
    %v147 = vpop.xlane.xlu0 %146
    %v148 = vsel %vm87, %v75, 0.0
    %149 = vadd.xlane.f32.xlu0 %v148
    %v150 = vpop.xlane.xlu0 %149
    %v151 = vsel %vm87, %v76, 0.0
    %152 = vadd.xlane.f32.xlu0 %v151
    %v153 = vpop.xlane.xlu0 %152
    %v154 = vsel %vm87, %v77, 0.0
    %155 = vadd.xlane.f32.xlu0 %v154
    %v156 = vpop.xlane.xlu0 %155
    %v157 = vsel %vm87, %v78, 0.0
    %158 = vadd.xlane.f32.xlu0 %v157
    %v159 = vpop.xlane.xlu0 %158
    %v160 = vsel %vm87, %v79, 0.0
    %161 = vadd.xlane.f32.xlu0 %v160
    %v162 = vpop.xlane.xlu0 %161
    %v163 = vsel %vm87, %v80, 0.0
    %164 = vadd.xlane.f32.xlu0 %v163
    %v165 = vpop.xlane.xlu0 %164
    %v166 = vsel %vm87, %v81, 0.0
    %167 = vadd.xlane.f32.xlu0 %v166
    %v168 = vpop.xlane.xlu0 %167
    %v169 = vsel %vm87, %v82, 0.0
    %170 = vadd.xlane.f32.xlu0 %v169
    %v171 = vpop.xlane.xlu0 %170
    %v172 = vsel %vm87, %v83, 0.0
    %173 = vadd.xlane.f32.xlu0 %v172
    %v174 = vpop.xlane.xlu0 %173
    %v175 = vsel %vm87, %v84, 0.0
    %176 = vadd.xlane.f32.xlu0 %v175
    %v177 = vpop.xlane.xlu0 %176
    %v178 = vsel %vm87, %v85, 0.0
    %179 = vadd.xlane.f32.xlu0 %v178
    %v180 = vpop.xlane.xlu0 %179
    %v181 = vsel %vm87, %v86, 0.0
    %182 = vadd.xlane.f32.xlu0 %v181
    %v183 = vpop.xlane.xlu0 %182
    %v184 = vrcp.pop 16.0
    %v185 = vmul.f32 %v90, %v184
    %v186 = vmul.f32 %v93, %v184
    %v187 = vmul.f32 %v96, %v184
    %v188 = vmul.f32 %v99, %v184
    %v189 = vmul.f32 %v102, %v184
    %v190 = vmul.f32 %v105, %v184
    %v191 = vmul.f32 %v108, %v184
    %v192 = vmul.f32 %v111, %v184
    %v193 = vmul.f32 %v114, %v184
    %v194 = vmul.f32 %v117, %v184
    %v195 = vmul.f32 %v120, %v184
    %v196 = vmul.f32 %v123, %v184
    %v197 = vmul.f32 %v126, %v184
    %v198 = vmul.f32 %v129, %v184
    %v199 = vmul.f32 %v132, %v184
    %v200 = vmul.f32 %v135, %v184
    %v201 = vmul.f32 %v138, %v184
    %v202 = vmul.f32 %v141, %v184
    %v203 = vmul.f32 %v144, %v184
    %v204 = vmul.f32 %v147, %v184
    %v205 = vmul.f32 %v150, %v184
    %v206 = vmul.f32 %v153, %v184
    %v207 = vmul.f32 %v156, %v184
    %v208 = vmul.f32 %v159, %v184
    %v209 = vmul.f32 %v162, %v184
    %v210 = vmul.f32 %v165, %v184
    %v211 = vmul.f32 %v168, %v184
    %v212 = vmul.f32 %v171, %v184
    %v213 = vmul.f32 %v174, %v184
    %v214 = vmul.f32 %v177, %v184
    %v215 = vmul.f32 %v180, %v184
    %v216 = vmul.f32 %v183, %v184
    %v217 = vsub.f32 %v55, %v185
    %v218 = vsub.f32 %v56, %v186
    %v219 = vsub.f32 %v57, %v187
    %v220 = vsub.f32 %v58, %v188
    %v221 = vsub.f32 %v59, %v189
    %v222 = vsub.f32 %v60, %v190
    %v223 = vsub.f32 %v61, %v191
    %v224 = vsub.f32 %v62, %v192
    %v225 = vsub.f32 %v63, %v193
    %v226 = vsub.f32 %v64, %v194
    %v227 = vsub.f32 %v65, %v195
    %v228 = vsub.f32 %v66, %v196
    %v229 = vsub.f32 %v67, %v197
    %v230 = vsub.f32 %v68, %v198
    %v231 = vsub.f32 %v69, %v199
    %v232 = vsub.f32 %v70, %v200
    %v233 = vsub.f32 %v71, %v201
    %v234 = vsub.f32 %v72, %v202
    %v235 = vsub.f32 %v73, %v203
    %v236 = vsub.f32 %v74, %v204
    %v237 = vsub.f32 %v75, %v205
    %v238 = vsub.f32 %v76, %v206
    %v239 = vsub.f32 %v77, %v207
    %v240 = vsub.f32 %v78, %v208
    %v241 = vsub.f32 %v79, %v209
    %v242 = vsub.f32 %v80, %v210
    %v243 = vsub.f32 %v81, %v211
    %v244 = vsub.f32 %v82, %v212
    %v245 = vsub.f32 %v83, %v213
    %v246 = vsub.f32 %v84, %v214
    %v247 = vsub.f32 %v85, %v215
    %v248 = vsub.f32 %v86, %v216
    %v249 = vmul.f32 %v217, %v217
    %v250 = vmul.f32 %v218, %v218
    %v251 = vmul.f32 %v219, %v219
    %v252 = vmul.f32 %v220, %v220
    %v253 = vmul.f32 %v221, %v221
    %v254 = vmul.f32 %v222, %v222
    %v255 = vmul.f32 %v223, %v223
    %v256 = vmul.f32 %v224, %v224
    %v257 = vmul.f32 %v225, %v225
    %v258 = vmul.f32 %v226, %v226
    %v259 = vmul.f32 %v227, %v227
    %v260 = vmul.f32 %v228, %v228
    %v261 = vmul.f32 %v229, %v229
    %v262 = vmul.f32 %v230, %v230
    %v263 = vmul.f32 %v231, %v231
    %v264 = vmul.f32 %v232, %v232
    %v265 = vmul.f32 %v233, %v233
    %v266 = vmul.f32 %v234, %v234
    %v267 = vmul.f32 %v235, %v235
    %v268 = vmul.f32 %v236, %v236
    %v269 = vmul.f32 %v237, %v237
    %v270 = vmul.f32 %v238, %v238
    %v271 = vmul.f32 %v239, %v239
    %v272 = vmul.f32 %v240, %v240
    %v273 = vmul.f32 %v241, %v241
    %v274 = vmul.f32 %v242, %v242
    %v275 = vmul.f32 %v243, %v243
    %v276 = vmul.f32 %v244, %v244
    %v277 = vmul.f32 %v245, %v245
    %v278 = vmul.f32 %v246, %v246
    %v279 = vmul.f32 %v247, %v247
    %v280 = vmul.f32 %v248, %v248
    %v281 = vsel %vm87, %v249, 0.0
    %282 = vadd.xlane.f32.xlu0 %v281
    %v283 = vpop.xlane.xlu0 %282
    %v284 = vsel %vm87, %v250, 0.0
    %285 = vadd.xlane.f32.xlu0 %v284
    %v286 = vpop.xlane.xlu0 %285
    %v287 = vsel %vm87, %v251, 0.0
    %288 = vadd.xlane.f32.xlu0 %v287
    %v289 = vpop.xlane.xlu0 %288
    %v290 = vsel %vm87, %v252, 0.0
    %291 = vadd.xlane.f32.xlu0 %v290
    %v292 = vpop.xlane.xlu0 %291
    %v293 = vsel %vm87, %v253, 0.0
    %294 = vadd.xlane.f32.xlu0 %v293
    %v295 = vpop.xlane.xlu0 %294
    %v296 = vsel %vm87, %v254, 0.0
    %297 = vadd.xlane.f32.xlu0 %v296
    %v298 = vpop.xlane.xlu0 %297
    %v299 = vsel %vm87, %v255, 0.0
    %300 = vadd.xlane.f32.xlu0 %v299
    %v301 = vpop.xlane.xlu0 %300
    %v302 = vsel %vm87, %v256, 0.0
    %303 = vadd.xlane.f32.xlu0 %v302
    %v304 = vpop.xlane.xlu0 %303
    %v305 = vsel %vm87, %v257, 0.0
    %306 = vadd.xlane.f32.xlu0 %v305
    %v307 = vpop.xlane.xlu0 %306
    %v308 = vsel %vm87, %v258, 0.0
    %309 = vadd.xlane.f32.xlu0 %v308
    %v310 = vpop.xlane.xlu0 %309
    %v311 = vsel %vm87, %v259, 0.0
    %312 = vadd.xlane.f32.xlu0 %v311
    %v313 = vpop.xlane.xlu0 %312
    %v314 = vsel %vm87, %v260, 0.0
    %315 = vadd.xlane.f32.xlu0 %v314
    %v316 = vpop.xlane.xlu0 %315
    %v317 = vsel %vm87, %v261, 0.0
    %318 = vadd.xlane.f32.xlu0 %v317
    %v319 = vpop.xlane.xlu0 %318
    %v320 = vsel %vm87, %v262, 0.0
    %321 = vadd.xlane.f32.xlu0 %v320
    %v322 = vpop.xlane.xlu0 %321
    %v323 = vsel %vm87, %v263, 0.0
    %324 = vadd.xlane.f32.xlu0 %v323
    %v325 = vpop.xlane.xlu0 %324
    %v326 = vsel %vm87, %v264, 0.0
    %327 = vadd.xlane.f32.xlu0 %v326
    %v328 = vpop.xlane.xlu0 %327
    %v329 = vsel %vm87, %v265, 0.0
    %330 = vadd.xlane.f32.xlu0 %v329
    %v331 = vpop.xlane.xlu0 %330
    %v332 = vsel %vm87, %v266, 0.0
    %333 = vadd.xlane.f32.xlu0 %v332
    %v334 = vpop.xlane.xlu0 %333
    %v335 = vsel %vm87, %v267, 0.0
    %336 = vadd.xlane.f32.xlu0 %v335
    %v337 = vpop.xlane.xlu0 %336
    %v338 = vsel %vm87, %v268, 0.0
    %339 = vadd.xlane.f32.xlu0 %v338
    %v340 = vpop.xlane.xlu0 %339
    %v341 = vsel %vm87, %v269, 0.0
    %342 = vadd.xlane.f32.xlu0 %v341
    %v343 = vpop.xlane.xlu0 %342
    %v344 = vsel %vm87, %v270, 0.0
    %345 = vadd.xlane.f32.xlu0 %v344
    %v346 = vpop.xlane.xlu0 %345
    %v347 = vsel %vm87, %v271, 0.0
    %348 = vadd.xlane.f32.xlu0 %v347
    %v349 = vpop.xlane.xlu0 %348
    %v350 = vsel %vm87, %v272, 0.0
    %351 = vadd.xlane.f32.xlu0 %v350
    %v352 = vpop.xlane.xlu0 %351
    %v353 = vsel %vm87, %v273, 0.0
    %354 = vadd.xlane.f32.xlu0 %v353
    %v355 = vpop.xlane.xlu0 %354
    %v356 = vsel %vm87, %v274, 0.0
    %357 = vadd.xlane.f32.xlu0 %v356
    %v358 = vpop.xlane.xlu0 %357
    %v359 = vsel %vm87, %v275, 0.0
    %360 = vadd.xlane.f32.xlu0 %v359
    %v361 = vpop.xlane.xlu0 %360
    %v362 = vsel %vm87, %v276, 0.0
    %363 = vadd.xlane.f32.xlu0 %v362
    %v364 = vpop.xlane.xlu0 %363
    %v365 = vsel %vm87, %v277, 0.0
    %366 = vadd.xlane.f32.xlu0 %v365
    %v367 = vpop.xlane.xlu0 %366
    %v368 = vsel %vm87, %v278, 0.0
    %369 = vadd.xlane.f32.xlu0 %v368
    %v370 = vpop.xlane.xlu0 %369
    %v371 = vsel %vm87, %v279, 0.0
    %372 = vadd.xlane.f32.xlu0 %v371
    %v373 = vpop.xlane.xlu0 %372
    %v374 = vsel %vm87, %v280, 0.0
    %375 = vadd.xlane.f32.xlu0 %v374
    %v376 = vpop.xlane.xlu0 %375
    %v377 = vmul.f32 %v283, %v184
    %v378 = vmul.f32 %v286, %v184
    %v379 = vmul.f32 %v289, %v184
    %v380 = vmul.f32 %v292, %v184
    %v381 = vmul.f32 %v295, %v184
    %v382 = vmul.f32 %v298, %v184
    %v383 = vmul.f32 %v301, %v184
    %v384 = vmul.f32 %v304, %v184
    %v385 = vmul.f32 %v307, %v184
    %v386 = vmul.f32 %v310, %v184
    %v387 = vmul.f32 %v313, %v184
    %v388 = vmul.f32 %v316, %v184
    %v389 = vmul.f32 %v319, %v184
    %v390 = vmul.f32 %v322, %v184
    %v391 = vmul.f32 %v325, %v184
    %v392 = vmul.f32 %v328, %v184
    %v393 = vmul.f32 %v331, %v184
    %v394 = vmul.f32 %v334, %v184
    %v395 = vmul.f32 %v337, %v184
    %v396 = vmul.f32 %v340, %v184
    %v397 = vmul.f32 %v343, %v184
    %v398 = vmul.f32 %v346, %v184
    %v399 = vmul.f32 %v349, %v184
    %v400 = vmul.f32 %v352, %v184
    %v401 = vmul.f32 %v355, %v184
    %v402 = vmul.f32 %v358, %v184
    %v403 = vmul.f32 %v361, %v184
    %v404 = vmul.f32 %v364, %v184
    %v405 = vmul.f32 %v367, %v184
    %v406 = vmul.f32 %v370, %v184
    %v407 = vmul.f32 %v373, %v184
    %v408 = vmul.f32 %v376, %v184
    %v409 = vadd.f32 %v377, 1e-05
    %v410 = vadd.f32 %v378, 1e-05
    %v411 = vadd.f32 %v379, 1e-05
    %v412 = vadd.f32 %v380, 1e-05
    %v413 = vadd.f32 %v381, 1e-05
    %v414 = vadd.f32 %v382, 1e-05
    %v415 = vadd.f32 %v383, 1e-05
    %v416 = vadd.f32 %v384, 1e-05
    %v417 = vadd.f32 %v385, 1e-05
    %v418 = vadd.f32 %v386, 1e-05
    %v419 = vadd.f32 %v387, 1e-05
    %v420 = vadd.f32 %v388, 1e-05
    %v421 = vadd.f32 %v389, 1e-05
    %v422 = vadd.f32 %v390, 1e-05
    %v423 = vadd.f32 %v391, 1e-05
    %v424 = vadd.f32 %v392, 1e-05
    %v425 = vadd.f32 %v393, 1e-05
    %v426 = vadd.f32 %v394, 1e-05
    %v427 = vadd.f32 %v395, 1e-05
    %v428 = vadd.f32 %v396, 1e-05
    %v429 = vadd.f32 %v397, 1e-05
    %v430 = vadd.f32 %v398, 1e-05
    %v431 = vadd.f32 %v399, 1e-05
    %v432 = vadd.f32 %v400, 1e-05
    %v433 = vadd.f32 %v401, 1e-05
    %v434 = vadd.f32 %v402, 1e-05
    %v435 = vadd.f32 %v403, 1e-05
    %v436 = vadd.f32 %v404, 1e-05
    %v437 = vadd.f32 %v405, 1e-05
    %v438 = vadd.f32 %v406, 1e-05
    %v439 = vadd.f32 %v407, 1e-05
    %v440 = vadd.f32 %v408, 1e-05
    %v441 = vrsqrt.pop %v409
    %v442 = vrsqrt.pop %v410
    %v443 = vrsqrt.pop %v411
    %v444 = vrsqrt.pop %v412
    %v445 = vrsqrt.pop %v413
    %v446 = vrsqrt.pop %v414
    %v447 = vrsqrt.pop %v415
    %v448 = vrsqrt.pop %v416
    %v449 = vrsqrt.pop %v417
    %v450 = vrsqrt.pop %v418
    %v451 = vrsqrt.pop %v419
    %v452 = vrsqrt.pop %v420
    %v453 = vrsqrt.pop %v421
    %v454 = vrsqrt.pop %v422
    %v455 = vrsqrt.pop %v423
    %v456 = vrsqrt.pop %v424
    %v457 = vrsqrt.pop %v425
    %v458 = vrsqrt.pop %v426
    %v459 = vrsqrt.pop %v427
    %v460 = vrsqrt.pop %v428
    %v461 = vrsqrt.pop %v429
    %v462 = vrsqrt.pop %v430
    %v463 = vrsqrt.pop %v431
    %v464 = vrsqrt.pop %v432
    %v465 = vrsqrt.pop %v433
    %v466 = vrsqrt.pop %v434
    %v467 = vrsqrt.pop %v435
    %v468 = vrsqrt.pop %v436
    %v469 = vrsqrt.pop %v437
    %v470 = vrsqrt.pop %v438
    %v471 = vrsqrt.pop %v439
    %v472 = vrsqrt.pop %v440
    %v473 = vmul.f32 %v217, %v441
    %v474 = vmul.f32 %v218, %v442
    %v475 = vmul.f32 %v219, %v443
    %v476 = vmul.f32 %v220, %v444
    %v477 = vmul.f32 %v221, %v445
    %v478 = vmul.f32 %v222, %v446
    %v479 = vmul.f32 %v223, %v447
    %v480 = vmul.f32 %v224, %v448
    %v481 = vmul.f32 %v225, %v449
    %v482 = vmul.f32 %v226, %v450
    %v483 = vmul.f32 %v227, %v451
    %v484 = vmul.f32 %v228, %v452
    %v485 = vmul.f32 %v229, %v453
    %v486 = vmul.f32 %v230, %v454
    %v487 = vmul.f32 %v231, %v455
    %v488 = vmul.f32 %v232, %v456
    %v489 = vmul.f32 %v233, %v457
    %v490 = vmul.f32 %v234, %v458
    %v491 = vmul.f32 %v235, %v459
    %v492 = vmul.f32 %v236, %v460
    %v493 = vmul.f32 %v237, %v461
    %v494 = vmul.f32 %v238, %v462
    %v495 = vmul.f32 %v239, %v463
    %v496 = vmul.f32 %v240, %v464
    %v497 = vmul.f32 %v241, %v465
    %v498 = vmul.f32 %v242, %v466
    %v499 = vmul.f32 %v243, %v467
    %v500 = vmul.f32 %v244, %v468
    %v501 = vmul.f32 %v245, %v469
    %v502 = vmul.f32 %v246, %v470
    %v503 = vmul.f32 %v247, %v471
    %v504 = vmul.f32 %v248, %v472
    %v505 = vld [vmem:[#allocation5] sm:$0x1]
    %v507 = vlaneseq
    %v508 = vshrl.u32 %v507, 7
    %v509 = vsub.s32 0, %v508
    %v510 = vrot.slane %v505, %v509
    %v512 = vmul.f32 %v473, %v510
    %v513 = vmul.f32 %v474, %v510
    %v514 = vmul.f32 %v475, %v510
    %v515 = vmul.f32 %v476, %v510
    %v516 = vmul.f32 %v477, %v510
    %v517 = vmul.f32 %v478, %v510
    %v518 = vmul.f32 %v479, %v510
    %v519 = vmul.f32 %v480, %v510
    %v520 = vmul.f32 %v481, %v510
    %v521 = vmul.f32 %v482, %v510
    %v522 = vmul.f32 %v483, %v510
    %v523 = vmul.f32 %v484, %v510
    %v524 = vmul.f32 %v485, %v510
    %v525 = vmul.f32 %v486, %v510
    %v526 = vmul.f32 %v487, %v510
    %v527 = vmul.f32 %v488, %v510
    %v528 = vmul.f32 %v489, %v510
    %v529 = vmul.f32 %v490, %v510
    %v530 = vmul.f32 %v491, %v510
    %v531 = vmul.f32 %v492, %v510
    %v532 = vmul.f32 %v493, %v510
    %v533 = vmul.f32 %v494, %v510
    %v534 = vmul.f32 %v495, %v510
    %v535 = vmul.f32 %v496, %v510
    %v536 = vmul.f32 %v497, %v510
    %v537 = vmul.f32 %v498, %v510
    %v538 = vmul.f32 %v499, %v510
    %v539 = vmul.f32 %v500, %v510
    %v540 = vmul.f32 %v501, %v510
    %v541 = vmul.f32 %v502, %v510
    %v542 = vmul.f32 %v503, %v510
    %v543 = vmul.f32 %v504, %v510
    %v544 = vpack.c.bf16 %v513, %v512
    %v545 = vpack.c.bf16 %v515, %v514
    %v546 = vpack.c.bf16 %v517, %v516
    %v547 = vpack.c.bf16 %v519, %v518
    %v548 = vpack.c.bf16 %v521, %v520
    %v549 = vpack.c.bf16 %v523, %v522
    %v550 = vpack.c.bf16 %v525, %v524
    %v551 = vpack.c.bf16 %v527, %v526
    %v552 = vpack.c.bf16 %v529, %v528
    %v553 = vpack.c.bf16 %v531, %v530
    %v554 = vpack.c.bf16 %v533, %v532
    %v555 = vpack.c.bf16 %v535, %v534
    %v556 = vpack.c.bf16 %v537, %v536
    %v557 = vpack.c.bf16 %v539, %v538
    %v558 = vpack.c.bf16 %v541, %v540
    %v559 = vpack.c.bf16 %v543, %v542
    %v560 = vld [vmem:[#allocation2] sm:$0xf]
    %v561 = vld [vmem:[#allocation2 + $0x4] sm:$0xf]
    %v564 = vunpack.c.l.b16 %v560
    %v565 = vunpack.c.l.b16 %v561
    %v566 = vpack.c.b16 %v565, %v564
    %v568 = vsel %vm87, %v566, 0
    %v571 = vsel %vm87, %v544, 0
    %v574 = vsel %vm87, %v545, 0
    %v577 = vsel %vm87, %v546, 0
    %v580 = vsel %vm87, %v547, 0
    %v583 = vsel %vm87, %v548, 0
    %v586 = vsel %vm87, %v549, 0
    %v589 = vsel %vm87, %v550, 0
    %v592 = vsel %vm87, %v551, 0
    %v595 = vsel %vm87, %v552, 0
    %v598 = vsel %vm87, %v553, 0
    %v601 = vsel %vm87, %v554, 0
    %v604 = vsel %vm87, %v555, 0
    %v607 = vsel %vm87, %v556, 0
    %v610 = vsel %vm87, %v557, 0
    %v613 = vsel %vm87, %v558, 0
    %v616 = vsel %vm87, %v559, 0
    %618 = vmatprep.subr.bf16.mxu0 0
    %619 = vmatpush1.bf16.xpose.msra.mxu0 %v571
    %620 = vmatprep.subr.bf16.mxu0 0
    %621 = vmatpush1.bf16.xpose.msra.mxu0 %v574
    %622 = vmatprep.subr.bf16.mxu0 0
    %623 = vmatpush1.bf16.xpose.msra.mxu0 %v577
    %624 = vmatprep.subr.bf16.mxu0 0
    %625 = vmatpush1.bf16.xpose.msra.mxu0 %v580
    %626 = vmatprep.subr.bf16.mxu0 0
    %627 = vmatpush1.bf16.xpose.msra.mxu0 %v583
    %628 = vmatprep.subr.bf16.mxu0 0
    %629 = vmatpush1.bf16.xpose.msra.mxu0 %v586
    %630 = vmatprep.subr.bf16.mxu0 0
    %631 = vmatpush1.bf16.xpose.msra.mxu0 %v589
    %632 = vmatprep.subr.bf16.mxu0 0
    %633 = vmatpush1.bf16.xpose.msra.mxu0 %v592
    %634 = vmatprep.subr.bf16.mxu0 0
    %635 = vmatpush1.bf16.xpose.msra.mxu0 %v595
    %636 = vmatprep.subr.bf16.mxu0 0
    %637 = vmatpush1.bf16.xpose.msra.mxu0 %v598
    %638 = vmatprep.subr.bf16.mxu0 0
    %639 = vmatpush1.bf16.xpose.msra.mxu0 %v601
    %640 = vmatprep.subr.bf16.mxu0 0
    %641 = vmatpush1.bf16.xpose.msra.mxu0 %v604
    %642 = vmatprep.subr.bf16.mxu0 0
    %643 = vmatpush1.bf16.xpose.msra.mxu0 %v607
    %644 = vmatprep.subr.bf16.mxu0 0
    %645 = vmatpush1.bf16.xpose.msra.mxu0 %v610
    %646 = vmatprep.subr.bf16.mxu0 0
    %647 = vmatpush1.bf16.xpose.msra.mxu0 %v613
    %648 = vmatprep.subr.bf16.mxu0 0
    %649 = vmatpush1.bf16.xpose.msra.mxu0 %v616
    %650 = vmatprep.mubr.bf16.mxu0 0
    %651 = vmatmul.mubr.bf16.gmra.mrb[0].mxu0 %v568
    %v652 = vpop.f32.mrb[0].mxu0
    %v653 = vadd.f32 0.0, %v652
    %v654 = vpop.f32.mrb[0].mxu0
    %v655 = vadd.f32 0.0, %v654
    %v656 = vpop.f32.mrb[0].mxu0
    %v657 = vadd.f32 0.0, %v656
    %v658 = vpop.f32.mrb[0].mxu0
    %v659 = vadd.f32 0.0, %v658
    %660 = vdwg.mxu0
    %v661 = vpack.c.bf16 %v657, %v653
    %v662 = vpack.c.bf16 %v659, %v655
    %v665 = vunpack.c.l.b16 %v661
    %v666 = vunpack.c.l.b16 %v662
    %v667 = vunpack.c.h.b16 %v661
    %v668 = vunpack.c.h.b16 %v662
    %v669 = vpack.c.b16 %v666, %v665
    %v670 = vpack.c.b16 %v668, %v667
    %673 = vst [vmem:[#allocation8] sm:$0xff] %v669
    %674 = vst [vmem:[#allocation8 + $0x8] sm:$0xff] %v670
    // Predicated region
    $region26: #{tpu_custom_call.1} parent=1 // pred_check
      _
    $region27: #{tpu_custom_call.1} parent=1 // pred_check_branch
      %676 = sbr.rel (0) target = $region29
    $region28: #{tpu_custom_call.1} parent=1 // pred_region
      %s678 = ssub.s32 256, 256
      %679 = vsyncadd [#allocation4], %s678
      %s680 = sshll.u32 [#allocation8], 4
      %s681 = int_to_ptr.vmem [resolvable:$true] %s680
      %686 = dma.vmem_to_hbm [thread:$0]  %s681, 256, %s3, [#allocation4], 128, 128, 8
    $region29: #{tpu_custom_call.1} parent=1 // pred_fallthru
      _
    // Predicated region
    $region30: #{tpu_custom_call.1} parent=1 // pred_check
      _
    $region31: #{tpu_custom_call.1} parent=1 // pred_check_branch
      %688 = sbr.rel (0) target = $region33
    $region32: #{tpu_custom_call.1} parent=1 // pred_region
      %689 = dma.done [#allocation4], 256
    $region33: #{tpu_custom_call.1} parent=1 // pred_fallthru
      _
    %690 = vsyncpa [#allocation3], 1
    %691 = vsyncpa [#allocation6], 1
    %692 = vsyncpa [#allocation4], 1

</llo_original>
